<compile_context>
chip_gen: v7x
topology: tpu7x:2x2x1
jax: 0.10.0
libtpu: 0.0.40
codegen_flags: <defaults>
</compile_context>

<pallas_src>
import numpy as np
import jax
import jax.numpy as jnp
from jax.experimental import pallas as pl
from jax.experimental.pallas import tpu as pltpu

EPS = 1e-7
N_HIDDEN = 32          # per-net hidden width (fused kernel uses 4 * 32 = 128 lanes)
N_OUT = 24             # per-net output width (8 nets x 3 splits)
N_NETS = 8             # scattering nets
AUX_W = 21             # [mu*(mu+eps) | tau_total | tau_total | mu_dir | mu_dif | sel_dir(8) | sel_dif(8)]


# ---------------------------------------------------------------------------
# Pallas kernel: fused direct+diffuse Scattering forward, 2 logical rows / vreg row
# ---------------------------------------------------------------------------
def _make_kernel(K):
    F = K + AUX_W  # features per logical row; physical row carries 2 logical rows (2F lanes)

    def kernel(x_ref, w0_ref, wh_ref, b_ref, sred_ref, out_ref):
        x = x_ref[...]                       # (TR, 2F)
        TR = x.shape[0]

        def recip_nr(v):
            r = pl.reciprocal(v, approx=True)
            return r * (2.0 - v * r)         # one Newton step (~1e-7 relative error)

        # --- per-row scalars for both interleaved rows, packed into narrow slabs ---
        tt4 = jnp.concatenate([x[:, K + 1:K + 3], x[:, F + K + 1:F + K + 3]], axis=1)   # [ttA,ttA,ttB,ttB]
        mu4 = jnp.concatenate([x[:, K + 3:K + 5], x[:, F + K + 3:F + K + 5]], axis=1)   # [mudA,mufA,mudB,mufB]
        sel32 = jnp.concatenate([x[:, K + 5:K + 21], x[:, F + K + 5:F + K + 21]], axis=1)
        # exact divide here: feeds exp(-tau_total/mu) and the MLP scaling (error amplified by tau)
        inv4 = 1.0 / (mu4 + EPS)
        t4 = jnp.exp(-tt4 * inv4)            # exp #1: [t_dirA, t_difA, t_dirB, t_difB]

        # --- fused block-diagonal MLP, hidden lanes [dirA(32)|difA(32)|dirB(32)|difB(32)] ---
        w0 = w0_ref[...]                     # (2F, 128)
        w1 = wh_ref[0:128, :]
        w2 = wh_ref[128:256, :]
        wo = wh_ref[256:384, :]
        b0 = b_ref[0:1, :]
        b1 = b_ref[1:2, :]
        b2 = b_ref[2:3, :]
        bo = b_ref[3:4, :]

        y = jnp.dot(x, w0, preferred_element_type=jnp.float32)          # (TR, 128)
        # scale the two "direct" 32-lane groups by 1/(mu_direct+eps); together with the
        # mu*(mu+eps) input feature this reproduces [tau/mu | mu] @ W0 exactly.
        lane = jax.lax.broadcasted_iota(jnp.int32, (TR, 128), 1)
        inv_a = jnp.broadcast_to(inv4[:, 0:1], (TR, 128))
        inv_b = jnp.broadcast_to(inv4[:, 2:3], (TR, 128))
        scale = (jnp.where(lane < 32, inv_a, 1.0) *
                 jnp.where(jnp.logical_and(lane >= 64, lane < 96), inv_b, 1.0))
        h = jnp.maximum(y * scale + b0, 0.0)
        h = jnp.maximum(jnp.dot(h, w1, preferred_element_type=jnp.float32) + b1, 0.0)
        h = jnp.maximum(jnp.dot(h, w2, preferred_element_type=jnp.float32) + b2, 0.0)
        o = jnp.dot(h, wo, preferred_element_type=jnp.float32) + bo     # (TR, 128); lanes 96: zero

        # --- per-net softmax over the 3 splits: one 96-lane exp ---
        # lane layout per split j (32 lanes): [dirA nets(8) | difA(8) | dirB(8) | difB(8)]
        o0 = o[:, 0:32]
        o1 = o[:, 32:64]
        o2 = o[:, 64:96]
        m = jnp.maximum(jnp.maximum(o0, o1), o2)
        e_all = jnp.exp(jnp.concatenate([o0 - m, o1 - m, o2 - m], axis=1))    # exp #2
        d = e_all[:, 0:32] + e_all[:, 32:64] + e_all[:, 64:96]                # >= 1
        sinv = sel32 * recip_nr(d)
        wp = e_all * jnp.concatenate([sinv, sinv, sinv], axis=1)              # (TR, 96)

        # --- grouped Conv2d (sum over the 8 nets) as one constant 0/1 matmul ---
        r = jnp.dot(wp, sred_ref[...], preferred_element_type=jnp.float32)    # (TR, 12)

        # --- final softmax over the 3 splits: one 12-lane exp ---
        r0 = r[:, 0:4]
        r1 = r[:, 4:8]
        r2 = r[:, 8:12]
        m2 = jnp.maximum(jnp.maximum(r0, r1), r2)
        ee = jnp.exp(jnp.concatenate([r0 - m2, r1 - m2, r2 - m2], axis=1))    # exp #3
        inv2 = recip_nr(ee[:, 0:4] + ee[:, 4:8] + ee[:, 8:12])
        p = ee * jnp.concatenate([inv2, inv2, inv2], axis=1)                  # (TR, 12)

        # packed per-pair output: [t4(4) | p0(4) | p1(4) | p2(4)]; reordered on the host
        out_ref[...] = jnp.concatenate([t4, p], axis=1)                       # (TR, 16)

    return kernel


# ---------------------------------------------------------------------------
# Parameter setup (deterministic synthetic init, matching torch.rand shapes)
# ---------------------------------------------------------------------------
def _block_diag_mask(nblocks, bh, bw):
    m = np.zeros((nblocks * bh, nblocks * bw), dtype=np.float32)
    for i in range(nblocks):
        m[i * bh:(i + 1) * bh, i * bw:(i + 1) * bw] = 1.0
    return jnp.asarray(m)


def init_params(key, n_channel, n_constituent):
    ks = jax.random.split(key, 32)
    u = lambda k, shape: jax.random.uniform(k, shape, dtype=jnp.float32)

    hid_mask = _block_diag_mask(4, 8, 8)      # (32, 32)
    out_mask = _block_diag_mask(8, 4, 3)      # (32, 24)
    K = n_constituent

    dW0_full = u(ks[0], (K + 1, N_HIDDEN))    # direct BD_32x24: n_input = K + 1
    params = dict(
        dW0=dW0_full[:K, :],
        dW0mu=dW0_full[K:K + 1, :],
        db0=u(ks[1], (1, N_HIDDEN)),
        dW1=hid_mask * u(ks[2], (N_HIDDEN, N_HIDDEN)),
        db1=u(ks[3], (1, N_HIDDEN)),
        dW2=hid_mask * u(ks[4], (N_HIDDEN, N_HIDDEN)),
        db2=u(ks[5], (1, N_HIDDEN)),
        dWo=out_mask * u(ks[6], (N_HIDDEN, N_OUT)),
        dbo=u(ks[7], (1, N_OUT)),
        # diffuse BD_32x24: n_input = K
        fW0=u(ks[8], (K, N_HIDDEN)),
        fb0=u(ks[9], (1, N_HIDDEN)),
        fW1=hid_mask * u(ks[10], (N_HIDDEN, N_HIDDEN)),
        fb1=u(ks[11], (1, N_HIDDEN)),
        fW2=hid_mask * u(ks[12], (N_HIDDEN, N_HIDDEN)),
        fb2=u(ks[13], (1, N_HIDDEN)),
        fWo=out_mask * u(ks[14], (N_HIDDEN, N_OUT)),
        fbo=u(ks[15], (1, N_OUT)),
        # grouped Conv2d weights: (n_channel, 1, 8, 1) -> (n_channel, 8)
        sel_direct=u(ks[16], (n_channel, N_NETS)) - 0.5,
        sel_diffuse=u(ks[17], (n_channel, N_NETS)) - 0.5,
    )
    return params


# ---------------------------------------------------------------------------
# Host-side weight fusion: 2-row-interleaved block-diagonal MLP, perm folded into Wo
# ---------------------------------------------------------------------------
def _fuse_params(params):
    K = params["fW0"].shape[0]
    F = K + AUX_W
    f32 = jnp.float32
    H = N_HIDDEN

    # first layer: tau -> [dir|dif] hidden, mu*(mu+eps) -> dir hidden (rank-1 row);
    # replicated block-diagonally for the two interleaved logical rows.
    w0 = jnp.zeros((2 * F, 4 * H), f32)
    for half in range(2):
        roff = half * F
        coff = half * 2 * H
        w0 = w0.at[roff:roff + K, coff:coff + H].set(params["dW0"])
        w0 = w0.at[roff:roff + K, coff + H:coff + 2 * H].set(params["fW0"])
        w0 = w0.at[roff + K:roff + K + 1, coff:coff + H].set(params["dW0mu"])

    def bd4(a, b):
        z = jnp.zeros((H, H), f32)
        return jnp.concatenate([
            jnp.concatenate([a, z, z, z], axis=1),
            jnp.concatenate([z, b, z, z], axis=1),
            jnp.concatenate([z, z, a, z], axis=1),
            jnp.concatenate([z, z, z, b], axis=1)], axis=0)

    w1 = bd4(params["dW1"], params["fW1"])                    # (128, 128)
    w2 = bd4(params["dW2"], params["fW2"])                    # (128, 128)

    # output layer: fold the (net, split) -> lane regroup permutation into the weights.
    # stream layout per split j (32 cols): [dirA(8) | difA(8) | dirB(8) | difB(8)].
    pa = np.zeros((2 * N_OUT, 96), np.float32)
    pb = np.zeros((2 * N_OUT, 96), np.float32)
    for g in range(N_NETS):
        for j in range(3):
            pa[3 * g + j, 32 * j + g] = 1.0
            pa[N_OUT + 3 * g + j, 32 * j + 8 + g] = 1.0
            pb[3 * g + j, 32 * j + 16 + g] = 1.0
            pb[N_OUT + 3 * g + j, 32 * j + 24 + g] = 1.0
    pa = jnp.asarray(pa)
    pb = jnp.asarray(pb)
    z24 = jnp.zeros((H, N_OUT), f32)
    wo64 = jnp.concatenate([
        jnp.concatenate([params["dWo"], z24], axis=1),
        jnp.concatenate([z24, params["fWo"]], axis=1)], axis=0)        # (64, 48)
    wo = jnp.zeros((4 * H, 4 * H), f32)
    wo = wo.at[0:2 * H, 0:96].set(wo64 @ pa)
    wo = wo.at[2 * H:4 * H, 0:96].set(wo64 @ pb)
    bo48 = jnp.concatenate([params["dbo"], params["fbo"]], axis=1)     # (1, 48)
    bo = jnp.zeros((1, 4 * H), f32).at[:, 0:96].set(bo48 @ pa + bo48 @ pb)

    b0 = jnp.tile(jnp.concatenate([params["db0"], params["fb0"]], axis=1), (1, 2))
    b1 = jnp.tile(jnp.concatenate([params["db1"], params["fb1"]], axis=1), (1, 2))
    b2 = jnp.tile(jnp.concatenate([params["db2"], params["fb2"]], axis=1), (1, 2))

    wh = jnp.concatenate([w1, w2, wo], axis=0)                 # (384, 128)
    bias = jnp.concatenate([b0, b1, b2, bo], axis=0)           # (4, 128)

    # grouped-conv reduction: sum over the 8 nets for each (split j, stream s)
    sred = np.zeros((96, 12), np.float32)
    for j in range(3):
        for s in range(4):
            for g in range(N_NETS):
                sred[32 * j + 8 * s + g, 4 * j + s] = 1.0
    return w0, wh, bias, jnp.asarray(sred)


# ---------------------------------------------------------------------------
# Wrapper
# ---------------------------------------------------------------------------
def _cdiv(a, b):
    return (a + b - 1) // b


def _round_up(x, m):
    return ((x + m - 1) // m) * m


def scattering_forward(params, tau, mu_direct, mu_diffuse, tile_rows=1024):
    n, C, K = tau.shape
    F = K + AUX_W
    R = n * C

    w0, wh, bias, sred = _fuse_params(params)

    # one merged per-row operand (row = sample * C + channel)
    tau_rows = tau.reshape(R, K).astype(jnp.float32)
    mu_dir_rows = jnp.broadcast_to(mu_direct.astype(jnp.float32)[:, None, :], (n, C, 1)).reshape(R, 1)
    mu_dif_rows = jnp.broadcast_to(mu_diffuse.astype(jnp.float32)[:, None, :], (n, C, 1)).reshape(R, 1)
    sel_dir_rows = jnp.broadcast_to(params["sel_direct"][None, :, :], (n, C, N_NETS)).reshape(R, N_NETS)
    sel_dif_rows = jnp.broadcast_to(params["sel_diffuse"][None, :, :], (n, C, N_NETS)).reshape(R, N_NETS)
    mu2 = mu_dir_rows * (mu_dir_rows + EPS)
    tt = jnp.sum(tau_rows, axis=1, keepdims=True)
    feats = jnp.concatenate(
        [tau_rows, mu2, tt, tt, mu_dir_rows, mu_dif_rows, sel_dir_rows, sel_dif_rows], axis=1)   # (R, F)

    # two logical rows per physical row; keep the grid step count even (v7x has 2 TCs).
    # Default tile_rows=1024 stays well inside the default scoped VMEM on v5e/v6e/v7x.
    rows2 = _cdiv(R, 2)
    TR = max(8, _round_up(min(int(tile_rows), _round_up(rows2, 8)), 8))
    steps = _cdiv(rows2, TR)
    if steps > 1 and steps % 2 == 1:
        steps += 1
        TR = max(8, _round_up(_cdiv(rows2, steps), 8))
    rows2_pad = steps * TR
    r_pad = 2 * rows2_pad
    if r_pad != R:
        feats = jnp.pad(feats, ((0, r_pad - R), (0, 0)), constant_values=1.0)
    x2 = feats.reshape(rows2_pad, 2 * F)

    kernel = _make_kernel(K)
    packed = pl.pallas_call(
        kernel,
        out_shape=jax.ShapeDtypeStruct((rows2_pad, 16), jnp.float32),
        grid=(steps,),
        in_specs=[
            pl.BlockSpec((TR, 2 * F), lambda i: (i, 0)),      # interleaved row features
            pl.BlockSpec((2 * F, 128), lambda i: (0, 0)),     # fused first-layer weights
            pl.BlockSpec((384, 128), lambda i: (0, 0)),       # fused [W1; W2; Wo(perm)]
            pl.BlockSpec((4, 128), lambda i: (0, 0)),         # fused biases
            pl.BlockSpec((96, 12), lambda i: (0, 0)),         # 8-net reduction matrix
        ],
        out_specs=pl.BlockSpec((TR, 16), lambda i: (i, 0)),
        compiler_params=pltpu.CompilerParams(dimension_semantics=("parallel",)),
    )(x2, w0, wh, bias, sred)

    # un-interleave the row pairs + lane reorder on the host (free layout plumbing)
    cols_a = jnp.asarray([0, 1, 4, 8, 12, 5, 9, 13])
    cols_b = jnp.asarray([2, 3, 6, 10, 14, 7, 11, 15])
    per_row = jnp.stack([packed[:, cols_a], packed[:, cols_b]], axis=1).reshape(r_pad, 8)[:R]
    t_dir = per_row[:, 0].reshape(n, C)
    t_dif = per_row[:, 1].reshape(n, C)
    e_dir = per_row[:, 2:5].reshape(n, C, 3)
    e_dif = per_row[:, 5:8].reshape(n, C, 3)
    return [t_dir, t_dif, e_dir, e_dif]


# ---------------------------------------------------------------------------
# Pure-JAX reference (mirrors the PyTorch forward, eval mode)
# ---------------------------------------------------------------------------
def scattering_reference(params, tau, mu_direct, mu_diffuse):
    n, C, K = tau.shape
    tau_total = jnp.sum(tau, axis=2)                              # (n, C)
    t_dir = jnp.exp(-tau_total / (mu_direct + EPS))               # (n, C)
    t_dif = jnp.exp(-tau_total / (mu_diffuse + EPS))
    mu_d = mu_direct[:, :, None]                                  # (n, 1, 1)
    tau_dir = tau / (mu_d + EPS)
    mu_rep = jnp.tile(mu_d, (1, C, 1))
    full_direct = jnp.concatenate([tau_dir, mu_rep], axis=2)      # (n, C, K+1)

    def bd(x, W0, b0, W1, b1, W2, b2, Wo, bo):
        h = jax.nn.relu(x @ W0 + b0)
        h = jax.nn.relu(h @ W1 + b1)
        h = jax.nn.relu(h @ W2 + b2)
        return h @ Wo + bo

    dW0_full = jnp.concatenate([params["dW0"], params["dW0mu"]], axis=0)
    e_dir = bd(full_direct, dW0_full, params["db0"], params["dW1"], params["db1"],
               params["dW2"], params["db2"], params["dWo"], params["dbo"])
    e_dif = bd(tau, params["fW0"], params["fb0"], params["fW1"], params["fb1"],
               params["fW2"], params["fb2"], params["fWo"], params["fbo"])

    def select(e, sel):
        e = e.reshape(n, C, N_NETS, 3)
        e = jax.nn.softmax(e, axis=-1)
        e = jnp.einsum("ncgj,cg->ncj", e, sel)                    # grouped conv (8,1)
        return jax.nn.softmax(e, axis=-1)

    return [t_dir, t_dif,
            select(e_dir, params["sel_direct"]),
            select(e_dif, params["sel_diffuse"])]


# ---------------------------------------------------------------------------
# Test
# ---------------------------------------------------------------------------
def _run_case(key, n_batch, n_channel, n_constituent, tile_rows):
    kp, kt, kd, kf = jax.random.split(key, 4)
    params = init_params(kp, n_channel, n_constituent)
    tau = jax.random.uniform(kt, (n_batch, n_channel, n_constituent), dtype=jnp.float32)
    mu_direct = jax.random.uniform(kd, (n_batch, 1), dtype=jnp.float32) + 0.1
    mu_diffuse = jax.random.uniform(kf, (n_batch, 1), dtype=jnp.float32) + 0.1

    outs = scattering_forward(params, tau, mu_direct, mu_diffuse, tile_rows=tile_rows)
    outs = jax.block_until_ready(outs)

    refs = scattering_reference(params, tau, mu_direct, mu_diffuse)
    for o, r in zip(outs, refs):
        np.testing.assert_allclose(np.asarray(o), np.asarray(r), rtol=1e-4, atol=1e-5)


if __name__ == "__main__":
    key = jax.random.PRNGKey(0)
    k1, k2 = jax.random.split(key)

    # small shapes consistent with the module (single tile)
    _run_case(k1, n_batch=2, n_channel=8, n_constituent=4, tile_rows=1024)

    # exercises row-pair padding + multi-step (even) grid: R = 37*30 = 1110 logical rows
    _run_case(k2, n_batch=37, n_channel=30, n_constituent=7, tile_rows=256)

    print("KERNEL_OK")
</pallas_src>

<mosaic_0001>
module attributes {stable_mosaic.version = 11 : i64} {
  func.func @kernel(%arg0: i32, %arg1: memref<8x50xf32, #tpu.memory_space<vmem>>, %arg2: memref<50x128xf32, #tpu.memory_space<vmem>>, %arg3: memref<384x128xf32, #tpu.memory_space<vmem>>, %arg4: memref<4x128xf32, #tpu.memory_space<vmem>>, %arg5: memref<96x12xf32, #tpu.memory_space<vmem>>, %arg6: memref<8x16xf32, #tpu.memory_space<vmem>>) attributes {dimension_semantics = [#tpu.dimension_semantics<parallel>], iteration_bounds = array<i64: 1>, scalar_prefetch = 0 : i64, scratch_operands = 0 : i64, tpu.core_type = #tpu.core_type<tc>, window_params = [{transform_indices = @transform_0, window_bounds = array<i64: 8, 50>}, {pipeline_mode = #tpu.pipeline_mode<synchronous>, transform_indices = @transform_1, window_bounds = array<i64: 50, 128>}, {pipeline_mode = #tpu.pipeline_mode<synchronous>, transform_indices = @transform_2, window_bounds = array<i64: 384, 128>}, {pipeline_mode = #tpu.pipeline_mode<synchronous>, transform_indices = @transform_3, window_bounds = array<i64: 4, 128>}, {pipeline_mode = #tpu.pipeline_mode<synchronous>, transform_indices = @transform_4, window_bounds = array<i64: 96, 12>}, {transform_indices = @transform_5, window_bounds = array<i64: 8, 16>}]} {
    %c0 = arith.constant 0 : index
    %c0_0 = arith.constant 0 : index
    %0 = vector.load %arg1[%c0, %c0_0] : memref<8x50xf32, #tpu.memory_space<vmem>>, vector<8x50xf32>
    %1 = vector.extract_strided_slice %0 {offsets = [0, 5], sizes = [8, 2], strides = [1, 1]} : vector<8x50xf32> to vector<8x2xf32>
    %2 = vector.extract_strided_slice %0 {offsets = [0, 30], sizes = [8, 2], strides = [1, 1]} : vector<8x50xf32> to vector<8x2xf32>
    %3 = tpu.concatenate %1, %2 in 1 : vector<8x2xf32>, vector<8x2xf32> -> vector<8x4xf32>
    %4 = vector.extract_strided_slice %0 {offsets = [0, 7], sizes = [8, 2], strides = [1, 1]} : vector<8x50xf32> to vector<8x2xf32>
    %5 = vector.extract_strided_slice %0 {offsets = [0, 32], sizes = [8, 2], strides = [1, 1]} : vector<8x50xf32> to vector<8x2xf32>
    %6 = tpu.concatenate %4, %5 in 1 : vector<8x2xf32>, vector<8x2xf32> -> vector<8x4xf32>
    %7 = vector.extract_strided_slice %0 {offsets = [0, 9], sizes = [8, 16], strides = [1, 1]} : vector<8x50xf32> to vector<8x16xf32>
    %8 = vector.extract_strided_slice %0 {offsets = [0, 34], sizes = [8, 16], strides = [1, 1]} : vector<8x50xf32> to vector<8x16xf32>
    %9 = tpu.concatenate %7, %8 in 1 : vector<8x16xf32>, vector<8x16xf32> -> vector<8x32xf32>
    %cst = arith.constant 1.000000e-07 : f32
    %10 = vector.broadcast %cst : f32 to vector<8x4xf32>
    %11 = arith.addf %6, %10 : vector<8x4xf32>
    %cst_1 = arith.constant 1.000000e+00 : f32
    %12 = vector.broadcast %cst_1 : f32 to vector<8x4xf32>
    %13 = arith.divf %12, %11 : vector<8x4xf32>
    %cst_2 = arith.constant 0.000000e+00 : f32
    %14 = vector.broadcast %cst_2 : f32 to vector<8x4xf32>
    %15 = arith.subf %14, %3 : vector<8x4xf32>
    %16 = arith.mulf %15, %13 : vector<8x4xf32>
    %17 = math.exp %16 : vector<8x4xf32>
    %c0_3 = arith.constant 0 : index
    %c0_4 = arith.constant 0 : index
    %18 = vector.load %arg2[%c0_3, %c0_4] : memref<50x128xf32, #tpu.memory_space<vmem>>, vector<50x128xf32>
    %c0_5 = arith.constant 0 : index
    %c0_6 = arith.constant 0 : index
    %19 = vector.load %arg3[%c0_5, %c0_6] : memref<384x128xf32, #tpu.memory_space<vmem>>, vector<128x128xf32>
    %c128 = arith.constant 128 : index
    %c0_7 = arith.constant 0 : index
    %20 = vector.load %arg3[%c128, %c0_7] : memref<384x128xf32, #tpu.memory_space<vmem>>, vector<128x128xf32>
    %c256 = arith.constant 256 : index
    %c0_8 = arith.constant 0 : index
    %21 = vector.load %arg3[%c256, %c0_8] : memref<384x128xf32, #tpu.memory_space<vmem>>, vector<128x128xf32>
    %c0_9 = arith.constant 0 : index
    %c0_10 = arith.constant 0 : index
    %22 = vector.load %arg4[%c0_9, %c0_10] : memref<4x128xf32, #tpu.memory_space<vmem>>, vector<1x128xf32>
    %c1 = arith.constant 1 : index
    %c0_11 = arith.constant 0 : index
    %23 = vector.load %arg4[%c1, %c0_11] : memref<4x128xf32, #tpu.memory_space<vmem>>, vector<1x128xf32>
    %c2 = arith.constant 2 : index
    %c0_12 = arith.constant 0 : index
    %24 = vector.load %arg4[%c2, %c0_12] : memref<4x128xf32, #tpu.memory_space<vmem>>, vector<1x128xf32>
    %c3 = arith.constant 3 : index
    %c0_13 = arith.constant 0 : index
    %25 = vector.load %arg4[%c3, %c0_13] : memref<4x128xf32, #tpu.memory_space<vmem>>, vector<1x128xf32>
    %cst_14 = arith.constant dense<0.000000e+00> : vector<8x128xf32>
    %26 = tpu.matmul %0, %18, %cst_14 {dimension_numbers = #tpu.dot_dimension_numbers<[1], [0], [0], [1], [0, 0, 1, 1], [], []>} : vector<8x50xf32>, vector<50x128xf32>, vector<8x128xf32> -> vector<8x128xf32>
    %27 = tpu.iota {dimensions = array<i32: 1>} : vector<8x128xi32>
    %28 = vector.extract_strided_slice %13 {offsets = [0, 0], sizes = [8, 1], strides = [1, 1]} : vector<8x4xf32> to vector<8x1xf32>
    %29 = vector.shape_cast %28 : vector<8x1xf32> to vector<8x1xf32>
    %30 = vector.broadcast %29 : vector<8x1xf32> to vector<8x128xf32>
    %31 = vector.extract_strided_slice %13 {offsets = [0, 2], sizes = [8, 1], strides = [1, 1]} : vector<8x4xf32> to vector<8x1xf32>
    %32 = vector.shape_cast %31 : vector<8x1xf32> to vector<8x1xf32>
    %33 = vector.broadcast %32 : vector<8x1xf32> to vector<8x128xf32>
    %c32_i32 = arith.constant 32 : i32
    %34 = vector.broadcast %c32_i32 : i32 to vector<8x128xi32>
    %35 = arith.cmpi slt, %27, %34 : vector<8x128xi32>
    %cst_15 = arith.constant 1.000000e+00 : f32
    %36 = vector.broadcast %cst_15 : f32 to vector<8x128xf32>
    %37 = arith.select %35, %30, %36 : vector<8x128xi1>, vector<8x128xf32>
    %c64_i32 = arith.constant 64 : i32
    %38 = vector.broadcast %c64_i32 : i32 to vector<8x128xi32>
    %39 = arith.cmpi sge, %27, %38 : vector<8x128xi32>
    %c96_i32 = arith.constant 96 : i32
    %40 = vector.broadcast %c96_i32 : i32 to vector<8x128xi32>
    %41 = arith.cmpi slt, %27, %40 : vector<8x128xi32>
    %42 = arith.andi %39, %41 : vector<8x128xi1>
    %cst_16 = arith.constant 1.000000e+00 : f32
    %43 = vector.broadcast %cst_16 : f32 to vector<8x128xf32>
    %44 = arith.select %42, %33, %43 : vector<8x128xi1>, vector<8x128xf32>
    %45 = arith.mulf %37, %44 : vector<8x128xf32>
    %46 = arith.mulf %26, %45 : vector<8x128xf32>
    %47 = vector.broadcast %22 : vector<1x128xf32> to vector<8x128xf32>
    %48 = arith.addf %46, %47 : vector<8x128xf32>
    %cst_17 = arith.constant 0.000000e+00 : f32
    %49 = vector.broadcast %cst_17 : f32 to vector<8x128xf32>
    %50 = arith.maximumf %48, %49 : vector<8x128xf32>
    %cst_18 = arith.constant dense<0.000000e+00> : vector<8x128xf32>
    %51 = tpu.matmul %50, %19, %cst_18 {dimension_numbers = #tpu.dot_dimension_numbers<[1], [0], [0], [1], [0, 0, 1, 1], [], []>} : vector<8x128xf32>, vector<128x128xf32>, vector<8x128xf32> -> vector<8x128xf32>
    %52 = vector.broadcast %23 : vector<1x128xf32> to vector<8x128xf32>
    %53 = arith.addf %51, %52 : vector<8x128xf32>
    %cst_19 = arith.constant 0.000000e+00 : f32
    %54 = vector.broadcast %cst_19 : f32 to vector<8x128xf32>
    %55 = arith.maximumf %53, %54 : vector<8x128xf32>
    %cst_20 = arith.constant dense<0.000000e+00> : vector<8x128xf32>
    %56 = tpu.matmul %55, %20, %cst_20 {dimension_numbers = #tpu.dot_dimension_numbers<[1], [0], [0], [1], [0, 0, 1, 1], [], []>} : vector<8x128xf32>, vector<128x128xf32>, vector<8x128xf32> -> vector<8x128xf32>
    %57 = vector.broadcast %24 : vector<1x128xf32> to vector<8x128xf32>
    %58 = arith.addf %56, %57 : vector<8x128xf32>
    %cst_21 = arith.constant 0.000000e+00 : f32
    %59 = vector.broadcast %cst_21 : f32 to vector<8x128xf32>
    %60 = arith.maximumf %58, %59 : vector<8x128xf32>
    %cst_22 = arith.constant dense<0.000000e+00> : vector<8x128xf32>
    %61 = tpu.matmul %60, %21, %cst_22 {dimension_numbers = #tpu.dot_dimension_numbers<[1], [0], [0], [1], [0, 0, 1, 1], [], []>} : vector<8x128xf32>, vector<128x128xf32>, vector<8x128xf32> -> vector<8x128xf32>
    %62 = vector.broadcast %25 : vector<1x128xf32> to vector<8x128xf32>
    %63 = arith.addf %61, %62 : vector<8x128xf32>
    %64 = vector.extract_strided_slice %63 {offsets = [0, 0], sizes = [8, 32], strides = [1, 1]} : vector<8x128xf32> to vector<8x32xf32>
    %65 = vector.extract_strided_slice %63 {offsets = [0, 32], sizes = [8, 32], strides = [1, 1]} : vector<8x128xf32> to vector<8x32xf32>
    %66 = vector.extract_strided_slice %63 {offsets = [0, 64], sizes = [8, 32], strides = [1, 1]} : vector<8x128xf32> to vector<8x32xf32>
    %67 = arith.maximumf %64, %65 : vector<8x32xf32>
    %68 = arith.maximumf %67, %66 : vector<8x32xf32>
    %69 = arith.subf %64, %68 : vector<8x32xf32>
    %70 = arith.subf %65, %68 : vector<8x32xf32>
    %71 = arith.subf %66, %68 : vector<8x32xf32>
    %72 = tpu.concatenate %69, %70, %71 in 1 : vector<8x32xf32>, vector<8x32xf32>, vector<8x32xf32> -> vector<8x96xf32>
    %73 = math.exp %72 : vector<8x96xf32>
    %74 = vector.extract_strided_slice %73 {offsets = [0, 0], sizes = [8, 32], strides = [1, 1]} : vector<8x96xf32> to vector<8x32xf32>
    %75 = vector.extract_strided_slice %73 {offsets = [0, 32], sizes = [8, 32], strides = [1, 1]} : vector<8x96xf32> to vector<8x32xf32>
    %76 = arith.addf %74, %75 : vector<8x32xf32>
    %77 = vector.extract_strided_slice %73 {offsets = [0, 64], sizes = [8, 32], strides = [1, 1]} : vector<8x96xf32> to vector<8x32xf32>
    %78 = arith.addf %76, %77 : vector<8x32xf32>
    %79 = tpu.reciprocal %78 {approx = true} : vector<8x32xf32> -> vector<8x32xf32>
    %80 = arith.mulf %78, %79 : vector<8x32xf32>
    %cst_23 = arith.constant 2.000000e+00 : f32
    %81 = vector.broadcast %cst_23 : f32 to vector<8x32xf32>
    %82 = arith.subf %81, %80 : vector<8x32xf32>
    %83 = arith.mulf %79, %82 : vector<8x32xf32>
    %84 = arith.mulf %9, %83 : vector<8x32xf32>
    %85 = tpu.concatenate %84, %84, %84 in 1 : vector<8x32xf32>, vector<8x32xf32>, vector<8x32xf32> -> vector<8x96xf32>
    %86 = arith.mulf %73, %85 : vector<8x96xf32>
    %c0_24 = arith.constant 0 : index
    %c0_25 = arith.constant 0 : index
    %87 = vector.load %arg5[%c0_24, %c0_25] : memref<96x12xf32, #tpu.memory_space<vmem>>, vector<96x12xf32>
    %cst_26 = arith.constant dense<0.000000e+00> : vector<8x12xf32>
    %88 = tpu.matmul %86, %87, %cst_26 {dimension_numbers = #tpu.dot_dimension_numbers<[1], [0], [0], [1], [0, 0, 1, 1], [], []>} : vector<8x96xf32>, vector<96x12xf32>, vector<8x12xf32> -> vector<8x12xf32>
    %89 = vector.extract_strided_slice %88 {offsets = [0, 0], sizes = [8, 4], strides = [1, 1]} : vector<8x12xf32> to vector<8x4xf32>
    %90 = vector.extract_strided_slice %88 {offsets = [0, 4], sizes = [8, 4], strides = [1, 1]} : vector<8x12xf32> to vector<8x4xf32>
    %91 = vector.extract_strided_slice %88 {offsets = [0, 8], sizes = [8, 4], strides = [1, 1]} : vector<8x12xf32> to vector<8x4xf32>
    %92 = arith.maximumf %89, %90 : vector<8x4xf32>
    %93 = arith.maximumf %92, %91 : vector<8x4xf32>
    %94 = arith.subf %89, %93 : vector<8x4xf32>
    %95 = arith.subf %90, %93 : vector<8x4xf32>
    %96 = arith.subf %91, %93 : vector<8x4xf32>
    %97 = tpu.concatenate %94, %95, %96 in 1 : vector<8x4xf32>, vector<8x4xf32>, vector<8x4xf32> -> vector<8x12xf32>
    %98 = math.exp %97 : vector<8x12xf32>
    %99 = vector.extract_strided_slice %98 {offsets = [0, 0], sizes = [8, 4], strides = [1, 1]} : vector<8x12xf32> to vector<8x4xf32>
    %100 = vector.extract_strided_slice %98 {offsets = [0, 4], sizes = [8, 4], strides = [1, 1]} : vector<8x12xf32> to vector<8x4xf32>
    %101 = arith.addf %99, %100 : vector<8x4xf32>
    %102 = vector.extract_strided_slice %98 {offsets = [0, 8], sizes = [8, 4], strides = [1, 1]} : vector<8x12xf32> to vector<8x4xf32>
    %103 = arith.addf %101, %102 : vector<8x4xf32>
    %104 = tpu.reciprocal %103 {approx = true} : vector<8x4xf32> -> vector<8x4xf32>
    %105 = arith.mulf %103, %104 : vector<8x4xf32>
    %cst_27 = arith.constant 2.000000e+00 : f32
    %106 = vector.broadcast %cst_27 : f32 to vector<8x4xf32>
    %107 = arith.subf %106, %105 : vector<8x4xf32>
    %108 = arith.mulf %104, %107 : vector<8x4xf32>
    %109 = tpu.concatenate %108, %108, %108 in 1 : vector<8x4xf32>, vector<8x4xf32>, vector<8x4xf32> -> vector<8x12xf32>
    %110 = arith.mulf %98, %109 : vector<8x12xf32>
    %111 = tpu.concatenate %17, %110 in 1 : vector<8x4xf32>, vector<8x12xf32> -> vector<8x16xf32>
    %c0_28 = arith.constant 0 : index
    %c0_29 = arith.constant 0 : index
    %112 = vector.load %arg6[%c0_28, %c0_29] : memref<8x16xf32, #tpu.memory_space<vmem>>, vector<8x16xf32>
    tpu.vector_store %arg6[%c0_28, %c0_29], %111 {strides = array<i32>} : memref<8x16xf32, #tpu.memory_space<vmem>>, vector<8x16xf32>,
    return
  }
  func.func @transform_0(%arg0: i32) -> (i32, i32) {
    %c0_i32 = arith.constant 0 : i32
    %c0_i32_0 = arith.constant 0 : i32
    return %arg0, %c0_i32 : i32, i32
  }
  func.func @transform_1(%arg0: i32) -> (i32, i32) {
    %c0_i32 = arith.constant 0 : i32
    %c0_i32_0 = arith.constant 0 : i32
    %c0_i32_1 = arith.constant 0 : i32
    return %c0_i32, %c0_i32_0 : i32, i32
  }
  func.func @transform_2(%arg0: i32) -> (i32, i32) {
    %c0_i32 = arith.constant 0 : i32
    %c0_i32_0 = arith.constant 0 : i32
    %c0_i32_1 = arith.constant 0 : i32
    return %c0_i32, %c0_i32_0 : i32, i32
  }
  func.func @transform_3(%arg0: i32) -> (i32, i32) {
    %c0_i32 = arith.constant 0 : i32
    %c0_i32_0 = arith.constant 0 : i32
    %c0_i32_1 = arith.constant 0 : i32
    return %c0_i32, %c0_i32_0 : i32, i32
  }
  func.func @transform_4(%arg0: i32) -> (i32, i32) {
    %c0_i32 = arith.constant 0 : i32
    %c0_i32_0 = arith.constant 0 : i32
    %c0_i32_1 = arith.constant 0 : i32
    return %c0_i32, %c0_i32_0 : i32, i32
  }
  func.func @transform_5(%arg0: i32) -> (i32, i32) {
    %c0_i32 = arith.constant 0 : i32
    %c0_i32_0 = arith.constant 0 : i32
    return %arg0, %c0_i32 : i32, i32
  }
}

</mosaic_0001>

<llo_original>
// kernel: tpu_custom_call.1
$region0: #{tpu_custom_call.1}
  #allocation0 [shape = 'u32[]', space=smem, size = 0x4, offset = 0x4, fixed_abs, tag = 'smem constant byte address 0x4 - core index']
  #allocation1 [shape = 'u32[144,128]{1,0:T(1,128)}', space=vmem, size = 0x12000, scoped, tag = 'internal scratch']
  %s0 = inlined_call_operand.vmem [shape: f32[8,50], index: 0, kind: input, shape index: {}]
  %s1 = inlined_call_operand.vmem [shape: f32[50,128], index: 1, kind: input, shape index: {}]
  %s2 = inlined_call_operand.hbm [shape: f32[384,128], index: 2, kind: input, shape index: {}]
  %s3 = inlined_call_operand.vmem [shape: f32[4,128], index: 3, kind: input, shape index: {}]
  %s4 = inlined_call_operand.vmem [shape: f32[96,12], index: 4, kind: input, shape index: {}]
  %s5 = inlined_call_operand.hbm [shape: f32[8,16], index: 5, kind: output, shape index: {}]
  %s6 = sld [smem:[#allocation0]]
  $region34: #{tpu_custom_call.1} parent=0
    _
  %s8 = ssub.s32 1, %s6
  %s9 = scalar_select 0, %s8, %s6
  $region1: #{tpu_custom_call.1} parent=0
    #allocation2 [shape = 'u8[196608]{0}', space=vmem, size = 0x30000, scoped, tag = 'input window, operand 2, single buffered']
    #allocation3 [shape = 's32[1]{0}', space=sflag, size = 0x4, scoped, tag = 'scoped memory for tpu_custom_call.1']
    #allocation4 [shape = 's32[1]{0}', space=sflag, size = 0x4, scoped, tag = 'scoped memory for tpu_custom_call.1']
    #allocation5 [shape = 'u8[4096]{0}', space=vmem, size = 0x1000, scoped, tag = 'output window, operand 0, single buffered']
    %10 = vsyncpa [#allocation3], 0
    %11 = vsyncpa [#allocation4], 0
    // Predicated region
    $region2: #{tpu_custom_call.1} parent=1 // pred_check
      _
    $region3: #{tpu_custom_call.1} parent=1 // pred_check_branch
      %13 = sbr.rel (0) target = $region5
    $region4: #{tpu_custom_call.1} parent=1 // pred_region
      _
    $region5: #{tpu_custom_call.1} parent=1 // pred_fallthru
      _
    // Predicated region
    $region6: #{tpu_custom_call.1} parent=1 // pred_check
      _
    $region7: #{tpu_custom_call.1} parent=1 // pred_check_branch
      %15 = sbr.rel (0) target = $region9
    $region8: #{tpu_custom_call.1} parent=1 // pred_region
      _
    $region9: #{tpu_custom_call.1} parent=1 // pred_fallthru
      _
    // Predicated region
    $region10: #{tpu_custom_call.1} parent=1 // pred_check
      _
    $region11: #{tpu_custom_call.1} parent=1 // pred_check_branch
      %17 = sbr.rel (0) target = $region13
    $region12: #{tpu_custom_call.1} parent=1 // pred_region
      %s19 = ssub.s32 6144, 6144
      %20 = vsyncadd [#allocation3], %s19
      %s21 = sshll.u32 [#allocation2], 4
      %s22 = int_to_ptr.vmem [resolvable:$true] %s21
      %27 = dma.hbm_to_vmem [thread:$0]  %s2, 6144, %s22, [#allocation3], 128, 128, 8
    $region13: #{tpu_custom_call.1} parent=1 // pred_fallthru
      _
    // Predicated region
    $region14: #{tpu_custom_call.1} parent=1 // pred_check
      _
    $region15: #{tpu_custom_call.1} parent=1 // pred_check_branch
      %29 = sbr.rel (0) target = $region17
    $region16: #{tpu_custom_call.1} parent=1 // pred_region
      _
    $region17: #{tpu_custom_call.1} parent=1 // pred_fallthru
      _
    // Predicated region
    $region18: #{tpu_custom_call.1} parent=1 // pred_check
      _
    $region19: #{tpu_custom_call.1} parent=1 // pred_check_branch
      %31 = sbr.rel (0) target = $region21
    $region20: #{tpu_custom_call.1} parent=1 // pred_region
      _
    $region21: #{tpu_custom_call.1} parent=1 // pred_fallthru
      _
    // Predicated region
    $region22: #{tpu_custom_call.1} parent=1 // pred_check
      _
    $region23: #{tpu_custom_call.1} parent=1 // pred_check_branch
      %33 = sbr.rel (0) target = $region25
    $region24: #{tpu_custom_call.1} parent=1 // pred_region
      %34 = dma.done [#allocation3], 6144
    $region25: #{tpu_custom_call.1} parent=1 // pred_fallthru
      _
    %v35 = vld [vmem:[%s0] sm:$0xff]
    %37 = vrot.lane.b32.xlu0 %v35, 123
    %v38 = vpop.permute.xlu0 %37
    %40 = vrot.lane.b32.xlu0 %v35, 100
    %v41 = vpop.permute.xlu0 %40
    %vm43 = vcmask 15360
    %v44 = vsel %vm43, %v38, %v41
    %45 = vrot.lane.b32.xlu0 %v35, 121
    %v46 = vpop.permute.xlu0 %45
    %48 = vrot.lane.b32.xlu0 %v35, 98
    %v49 = vpop.permute.xlu0 %48
    %v51 = vsel %vm43, %v46, %v49
    %52 = vrot.lane.b32.xlu0 %v35, 119
    %v53 = vpop.permute.xlu0 %52
    %55 = vrot.lane.b32.xlu0 %v35, 110
    %v56 = vpop.permute.xlu0 %55
    %vm58 = vcmask 130048
    %v59 = vsel %vm58, %v53, %v56
    %v60 = vadd.f32 %v51, 1e-07
    %v61 = vrcp.pop %v60
    %v62 = vmul.f32 1.0, %v61
    %v63 = vsub.f32 0.0, %v44
    %v64 = vmul.f32 %v63, %v62
    %v65 = vmul.f32 %v64, 1.442695
    %v66 = vpow.pop %v65
    %v67 = vld [vmem:[%s1] sm:$0xff]
    %v68 = vld [vmem:[%s1 + $0x8] sm:$0xff]
    %v69 = vld [vmem:[%s1 + $0x10] sm:$0xff]
    %v70 = vld [vmem:[%s1 + $0x18] sm:$0xff]
    %v71 = vld [vmem:[%s1 + $0x20] sm:$0xff]
    %v72 = vld [vmem:[%s1 + $0x28] sm:$0xff]
    %v73 = vld [vmem:[%s1 + $0x30] sm:$0x3]
    %v74 = vld [vmem:[#allocation2] sm:$0xff]
    %v75 = vld [vmem:[#allocation2 + $0x8] sm:$0xff]
    %v76 = vld [vmem:[#allocation2 + $0x10] sm:$0xff]
    %v77 = vld [vmem:[#allocation2 + $0x18] sm:$0xff]
    %v78 = vld [vmem:[#allocation2 + $0x20] sm:$0xff]
    %v79 = vld [vmem:[#allocation2 + $0x28] sm:$0xff]
    %v80 = vld [vmem:[#allocation2 + $0x30] sm:$0xff]
    %v81 = vld [vmem:[#allocation2 + $0x38] sm:$0xff]
    %v82 = vld [vmem:[#allocation2 + $0x40] sm:$0xff]
    %v83 = vld [vmem:[#allocation2 + $0x48] sm:$0xff]
    %v84 = vld [vmem:[#allocation2 + $0x50] sm:$0xff]
    %v85 = vld [vmem:[#allocation2 + $0x58] sm:$0xff]
    %v86 = vld [vmem:[#allocation2 + $0x60] sm:$0xff]
    %v87 = vld [vmem:[#allocation2 + $0x68] sm:$0xff]
    %v88 = vld [vmem:[#allocation2 + $0x70] sm:$0xff]
    %v89 = vld [vmem:[#allocation2 + $0x78] sm:$0xff]
    %v90 = vld [vmem:[#allocation2 + $0x80] sm:$0xff]
    %v91 = vld [vmem:[#allocation2 + $0x88] sm:$0xff]
    %v92 = vld [vmem:[#allocation2 + $0x90] sm:$0xff]
    %v93 = vld [vmem:[#allocation2 + $0x98] sm:$0xff]
    %v94 = vld [vmem:[#allocation2 + $0xa0] sm:$0xff]
    %v95 = vld [vmem:[#allocation2 + $0xa8] sm:$0xff]
    %v96 = vld [vmem:[#allocation2 + $0xb0] sm:$0xff]
    %v97 = vld [vmem:[#allocation2 + $0xb8] sm:$0xff]
    %v98 = vld [vmem:[#allocation2 + $0xc0] sm:$0xff]
    %v99 = vld [vmem:[#allocation2 + $0xc8] sm:$0xff]
    %v100 = vld [vmem:[#allocation2 + $0xd0] sm:$0xff]
    %v101 = vld [vmem:[#allocation2 + $0xd8] sm:$0xff]
    %v102 = vld [vmem:[#allocation2 + $0xe0] sm:$0xff]
    %v103 = vld [vmem:[#allocation2 + $0xe8] sm:$0xff]
    %v104 = vld [vmem:[#allocation2 + $0xf0] sm:$0xff]
    %v105 = vld [vmem:[#allocation2 + $0xf8] sm:$0xff]
    %v106 = vld [vmem:[#allocation2 + $0x100] sm:$0xff]
    %v107 = vld [vmem:[#allocation2 + $0x108] sm:$0xff]
    %v108 = vld [vmem:[#allocation2 + $0x110] sm:$0xff]
    %v109 = vld [vmem:[#allocation2 + $0x118] sm:$0xff]
    %v110 = vld [vmem:[#allocation2 + $0x120] sm:$0xff]
    %v111 = vld [vmem:[#allocation2 + $0x128] sm:$0xff]
    %v112 = vld [vmem:[#allocation2 + $0x130] sm:$0xff]
    %v113 = vld [vmem:[#allocation2 + $0x138] sm:$0xff]
    %v114 = vld [vmem:[#allocation2 + $0x140] sm:$0xff]
    %v115 = vld [vmem:[#allocation2 + $0x148] sm:$0xff]
    %v116 = vld [vmem:[#allocation2 + $0x150] sm:$0xff]
    %v117 = vld [vmem:[#allocation2 + $0x158] sm:$0xff]
    %v118 = vld [vmem:[#allocation2 + $0x160] sm:$0xff]
    %v119 = vld [vmem:[#allocation2 + $0x168] sm:$0xff]
    %v120 = vld [vmem:[#allocation2 + $0x170] sm:$0xff]
    %v121 = vld [vmem:[#allocation2 + $0x178] sm:$0xff]
    %v122 = vld [vmem:[%s3] sm:$0x1]
    %v123 = vld [vmem:[%s3 + $0x1] sm:$0x1]
    %v124 = vld [vmem:[%s3 + $0x2] sm:$0x1]
    %v125 = vld [vmem:[%s3 + $0x3] sm:$0x1]
    %vm126 = vcmask 408576
    %v127 = vsel %vm126, %v35, 0
    %vm129 = vcmask 1041408
    %v131 = vsel %vm129, %v73, 0
    %133 = vmatprep.subr.mxu0 0.0
    %134 = vmatpush1.msra.mxu0 %v67
    %135 = vmatprep.subr.mxu0 0.0
    %136 = vmatpush1.msra.mxu0 %v68
    %137 = vmatprep.subr.mxu0 0.0
    %138 = vmatpush1.msra.mxu0 %v69
    %139 = vmatprep.subr.mxu0 0.0
    %140 = vmatpush1.msra.mxu0 %v70
    %141 = vmatprep.subr.mxu0 0.0
    %142 = vmatpush1.msra.mxu0 %v71
    %143 = vmatprep.subr.mxu0 0.0
    %144 = vmatpush1.msra.mxu0 %v72
    %145 = vmatprep.subr.mxu0 0.0
    %146 = vmatpush1.msra.mxu0 %v131
    %147 = vmatprep.subr.mxu0 0.0
    %148 = vmatpush1.msra.mxu0 0.0
    %149 = vmatprep.subr.mxu0 0.0
    %150 = vmatpush1.msra.mxu0 0.0
    %151 = vmatprep.subr.mxu0 0.0
    %152 = vmatpush1.msra.mxu0 0.0
    %153 = vmatprep.subr.mxu0 0.0
    %154 = vmatpush1.msra.mxu0 0.0
    %155 = vmatprep.subr.mxu0 0.0
    %156 = vmatpush1.msra.mxu0 0.0
    %157 = vmatprep.subr.mxu0 0.0
    %158 = vmatpush1.msra.mxu0 0.0
    %159 = vmatprep.subr.mxu0 0.0
    %160 = vmatpush1.msra.mxu0 0.0
    %161 = vmatprep.subr.mxu0 0.0
    %162 = vmatpush1.msra.mxu0 0.0
    %163 = vmatprep.subr.mxu0 0.0
    %164 = vmatpush1.msra.mxu0 0.0
    %165 = vmatprep.subr.mxu0 0.0
    %166 = vmatpush1.msra.mxu0 0.0
    %167 = vmatprep.subr.mxu0 0.0
    %168 = vmatpush1.msra.mxu0 0.0
    %169 = vmatprep.subr.mxu0 0.0
    %170 = vmatpush1.msra.mxu0 0.0
    %171 = vmatprep.subr.mxu0 0.0
    %172 = vmatpush1.msra.mxu0 0.0
    %173 = vmatprep.subr.mxu0 0.0
    %174 = vmatpush1.msra.mxu0 0.0
    %175 = vmatprep.subr.mxu0 0.0
    %176 = vmatpush1.msra.mxu0 0.0
    %177 = vmatprep.subr.mxu0 0.0
    %178 = vmatpush1.msra.mxu0 0.0
    %179 = vmatprep.subr.mxu0 0.0
    %180 = vmatpush1.msra.mxu0 0.0
    %181 = vmatprep.subr.mxu0 0.0
    %182 = vmatpush1.msra.mxu0 0.0
    %183 = vmatprep.subr.mxu0 0.0
    %184 = vmatpush1.msra.mxu0 0.0
    %185 = vmatprep.subr.mxu0 0.0
    %186 = vmatpush1.msra.mxu0 0.0
    %187 = vmatprep.subr.mxu0 0.0
    %188 = vmatpush1.msra.mxu0 0.0
    %189 = vmatprep.subr.mxu0 0.0
    %190 = vmatpush1.msra.mxu0 0.0
    %191 = vmatprep.subr.mxu0 0.0
    %192 = vmatpush1.msra.mxu0 0.0
    %193 = vmatprep.subr.mxu0 0.0
    %194 = vmatpush1.msra.mxu0 0.0
    %195 = vmatprep.subr.mxu0 0.0
    %196 = vmatpush1.msra.mxu0 0.0
    %197 = vmatprep.mubr.f32.mxu0 0.0
    %198 = vmatmul.mubr.f32.gmra.mrb[0].mxu0 %v127
    %v199 = vpop.f32.mrb[0].mxu0
    %v200 = vadd.f32 0.0, %v199
    %v201 = vpop.f32.mrb[0].mxu0
    %202 = vdwg.mxu0
    %v203 = vlaneseq
    %v204 = vand.u32 %v203, 127
    %206 = vset.pattern.permute.xlu0 0
    %207 = vperm.xlu0 %206, %v62
    %v208 = vpop.permute.xlu0 %207
    %210 = vset.pattern.permute.xlu0 2
    %211 = vperm.xlu0 %210, %v62
    %v212 = vpop.permute.xlu0 %211
    %vm214 = vcmp.lt.s32.totalorder %v204, 32
    %v215 = vsel %vm214, %v208, 1.0
    %vm216 = vcmp.ge.s32.totalorder %v204, 64
    %vm217 = vcmp.lt.s32.totalorder %v204, 96
    %vm218 = vmand %vm216, %vm217
    %v219 = vsel %vm218, %v212, 1.0
    %v220 = vmul.f32 %v215, %v219
    %v221 = vmul.f32 %v200, %v220
    %v222 = vlaneseq
    %v223 = vshrl.u32 %v222, 7
    %v224 = vsub.s32 0, %v223
    %v225 = vrot.slane %v122, %v224
    %v226 = vadd.f32 %v221, %v225
    %v227 = vmax.f32 %v226, 0.0
    %v228 = vlaneseq
    %v229 = vshrl.u32 %v228, 7
    %v230 = vsub.s32 0, %v229
    %v231 = vrot.slane %v123, %v230
    %232 = vmatprep.subr.mxu0 0.0
    %233 = vmatpush1.msra.mxu0 %v74
    %234 = vmatprep.subr.mxu0 0.0
    %235 = vmatpush1.msra.mxu0 %v75
    %236 = vmatprep.subr.mxu0 0.0
    %237 = vmatpush1.msra.mxu0 %v76
    %238 = vmatprep.subr.mxu0 0.0
    %239 = vmatpush1.msra.mxu0 %v77
    %240 = vmatprep.subr.mxu0 0.0
    %241 = vmatpush1.msra.mxu0 %v78
    %242 = vmatprep.subr.mxu0 0.0
    %243 = vmatpush1.msra.mxu0 %v79
    %244 = vmatprep.subr.mxu0 0.0
    %245 = vmatpush1.msra.mxu0 %v80
    %246 = vmatprep.subr.mxu0 0.0
    %247 = vmatpush1.msra.mxu0 %v81
    %248 = vmatprep.subr.mxu0 0.0
    %249 = vmatpush1.msra.mxu0 %v82
    %250 = vmatprep.subr.mxu0 0.0
    %251 = vmatpush1.msra.mxu0 %v83
    %252 = vmatprep.subr.mxu0 0.0
    %253 = vmatpush1.msra.mxu0 %v84
    %254 = vmatprep.subr.mxu0 0.0
    %255 = vmatpush1.msra.mxu0 %v85
    %256 = vmatprep.subr.mxu0 0.0
    %257 = vmatpush1.msra.mxu0 %v86
    %258 = vmatprep.subr.mxu0 0.0
    %259 = vmatpush1.msra.mxu0 %v87
    %260 = vmatprep.subr.mxu0 0.0
    %261 = vmatpush1.msra.mxu0 %v88
    %262 = vmatprep.subr.mxu0 0.0
    %263 = vmatpush1.msra.mxu0 %v89
    %264 = vmatprep.subr.mxu0 0.0
    %265 = vmatpush1.msra.mxu0 0.0
    %266 = vmatprep.subr.mxu0 0.0
    %267 = vmatpush1.msra.mxu0 0.0
    %268 = vmatprep.subr.mxu0 0.0
    %269 = vmatpush1.msra.mxu0 0.0
    %270 = vmatprep.subr.mxu0 0.0
    %271 = vmatpush1.msra.mxu0 0.0
    %272 = vmatprep.subr.mxu0 0.0
    %273 = vmatpush1.msra.mxu0 0.0
    %274 = vmatprep.subr.mxu0 0.0
    %275 = vmatpush1.msra.mxu0 0.0
    %276 = vmatprep.subr.mxu0 0.0
    %277 = vmatpush1.msra.mxu0 0.0
    %278 = vmatprep.subr.mxu0 0.0
    %279 = vmatpush1.msra.mxu0 0.0
    %280 = vmatprep.subr.mxu0 0.0
    %281 = vmatpush1.msra.mxu0 0.0
    %282 = vmatprep.subr.mxu0 0.0
    %283 = vmatpush1.msra.mxu0 0.0
    %284 = vmatprep.subr.mxu0 0.0
    %285 = vmatpush1.msra.mxu0 0.0
    %286 = vmatprep.subr.mxu0 0.0
    %287 = vmatpush1.msra.mxu0 0.0
    %288 = vmatprep.subr.mxu0 0.0
    %289 = vmatpush1.msra.mxu0 0.0
    %290 = vmatprep.subr.mxu0 0.0
    %291 = vmatpush1.msra.mxu0 0.0
    %292 = vmatprep.subr.mxu0 0.0
    %293 = vmatpush1.msra.mxu0 0.0
    %294 = vmatprep.subr.mxu0 0.0
    %295 = vmatpush1.msra.mxu0 0.0
    %296 = vmatprep.mubr.f32.mxu0 0.0
    %297 = vmatmul.mubr.f32.gmra.mrb[0].mxu0 %v227
    %v298 = vpop.f32.mrb[0].mxu0
    %v299 = vadd.f32 %v231, %v298
    %v300 = vpop.f32.mrb[0].mxu0
    %301 = vdwg.mxu0
    %v302 = vmax.f32 %v299, 0.0
    %v303 = vlaneseq
    %v304 = vshrl.u32 %v303, 7
    %v305 = vsub.s32 0, %v304
    %v306 = vrot.slane %v124, %v305
    %307 = vmatprep.subr.mxu0 0.0
    %308 = vmatpush1.msra.mxu0 %v90
    %309 = vmatprep.subr.mxu0 0.0
    %310 = vmatpush1.msra.mxu0 %v91
    %311 = vmatprep.subr.mxu0 0.0
    %312 = vmatpush1.msra.mxu0 %v92
    %313 = vmatprep.subr.mxu0 0.0
    %314 = vmatpush1.msra.mxu0 %v93
    %315 = vmatprep.subr.mxu0 0.0
    %316 = vmatpush1.msra.mxu0 %v94
    %317 = vmatprep.subr.mxu0 0.0
    %318 = vmatpush1.msra.mxu0 %v95
    %319 = vmatprep.subr.mxu0 0.0
    %320 = vmatpush1.msra.mxu0 %v96
    %321 = vmatprep.subr.mxu0 0.0
    %322 = vmatpush1.msra.mxu0 %v97
    %323 = vmatprep.subr.mxu0 0.0
    %324 = vmatpush1.msra.mxu0 %v98
    %325 = vmatprep.subr.mxu0 0.0
    %326 = vmatpush1.msra.mxu0 %v99
    %327 = vmatprep.subr.mxu0 0.0
    %328 = vmatpush1.msra.mxu0 %v100
    %329 = vmatprep.subr.mxu0 0.0
    %330 = vmatpush1.msra.mxu0 %v101
    %331 = vmatprep.subr.mxu0 0.0
    %332 = vmatpush1.msra.mxu0 %v102
    %333 = vmatprep.subr.mxu0 0.0
    %334 = vmatpush1.msra.mxu0 %v103
    %335 = vmatprep.subr.mxu0 0.0
    %336 = vmatpush1.msra.mxu0 %v104
    %337 = vmatprep.subr.mxu0 0.0
    %338 = vmatpush1.msra.mxu0 %v105
    %339 = vmatprep.subr.mxu0 0.0
    %340 = vmatpush1.msra.mxu0 0.0
    %341 = vmatprep.subr.mxu0 0.0
    %342 = vmatpush1.msra.mxu0 0.0
    %343 = vmatprep.subr.mxu0 0.0
    %344 = vmatpush1.msra.mxu0 0.0
    %345 = vmatprep.subr.mxu0 0.0
    %346 = vmatpush1.msra.mxu0 0.0
    %347 = vmatprep.subr.mxu0 0.0
    %348 = vmatpush1.msra.mxu0 0.0
    %349 = vmatprep.subr.mxu0 0.0
    %350 = vmatpush1.msra.mxu0 0.0
    %351 = vmatprep.subr.mxu0 0.0
    %352 = vmatpush1.msra.mxu0 0.0
    %353 = vmatprep.subr.mxu0 0.0
    %354 = vmatpush1.msra.mxu0 0.0
    %355 = vmatprep.subr.mxu0 0.0
    %356 = vmatpush1.msra.mxu0 0.0
    %357 = vmatprep.subr.mxu0 0.0
    %358 = vmatpush1.msra.mxu0 0.0
    %359 = vmatprep.subr.mxu0 0.0
    %360 = vmatpush1.msra.mxu0 0.0
    %361 = vmatprep.subr.mxu0 0.0
    %362 = vmatpush1.msra.mxu0 0.0
    %363 = vmatprep.subr.mxu0 0.0
    %364 = vmatpush1.msra.mxu0 0.0
    %365 = vmatprep.subr.mxu0 0.0
    %366 = vmatpush1.msra.mxu0 0.0
    %367 = vmatprep.subr.mxu0 0.0
    %368 = vmatpush1.msra.mxu0 0.0
    %369 = vmatprep.subr.mxu0 0.0
    %370 = vmatpush1.msra.mxu0 0.0
    %371 = vmatprep.mubr.f32.mxu0 0.0
    %372 = vmatmul.mubr.f32.gmra.mrb[0].mxu0 %v302
    %v373 = vpop.f32.mrb[0].mxu0
    %v374 = vadd.f32 %v306, %v373
    %v375 = vpop.f32.mrb[0].mxu0
    %376 = vdwg.mxu0
    %v377 = vmax.f32 %v374, 0.0
    %v378 = vlaneseq
    %v379 = vshrl.u32 %v378, 7
    %v380 = vsub.s32 0, %v379
    %v381 = vrot.slane %v125, %v380
    %382 = vmatprep.subr.mxu0 0.0
    %383 = vmatpush1.msra.mxu0 %v106
    %384 = vmatprep.subr.mxu0 0.0
    %385 = vmatpush1.msra.mxu0 %v107
    %386 = vmatprep.subr.mxu0 0.0
    %387 = vmatpush1.msra.mxu0 %v108
    %388 = vmatprep.subr.mxu0 0.0
    %389 = vmatpush1.msra.mxu0 %v109
    %390 = vmatprep.subr.mxu0 0.0
    %391 = vmatpush1.msra.mxu0 %v110
    %392 = vmatprep.subr.mxu0 0.0
    %393 = vmatpush1.msra.mxu0 %v111
    %394 = vmatprep.subr.mxu0 0.0
    %395 = vmatpush1.msra.mxu0 %v112
    %396 = vmatprep.subr.mxu0 0.0
    %397 = vmatpush1.msra.mxu0 %v113
    %398 = vmatprep.subr.mxu0 0.0
    %399 = vmatpush1.msra.mxu0 %v114
    %400 = vmatprep.subr.mxu0 0.0
    %401 = vmatpush1.msra.mxu0 %v115
    %402 = vmatprep.subr.mxu0 0.0
    %403 = vmatpush1.msra.mxu0 %v116
    %404 = vmatprep.subr.mxu0 0.0
    %405 = vmatpush1.msra.mxu0 %v117
    %406 = vmatprep.subr.mxu0 0.0
    %407 = vmatpush1.msra.mxu0 %v118
    %408 = vmatprep.subr.mxu0 0.0
    %409 = vmatpush1.msra.mxu0 %v119
    %410 = vmatprep.subr.mxu0 0.0
    %411 = vmatpush1.msra.mxu0 %v120
    %412 = vmatprep.subr.mxu0 0.0
    %413 = vmatpush1.msra.mxu0 %v121
    %414 = vmatprep.subr.mxu0 0.0
    %415 = vmatpush1.msra.mxu0 0.0
    %416 = vmatprep.subr.mxu0 0.0
    %417 = vmatpush1.msra.mxu0 0.0
    %418 = vmatprep.subr.mxu0 0.0
    %419 = vmatpush1.msra.mxu0 0.0
    %420 = vmatprep.subr.mxu0 0.0
    %421 = vmatpush1.msra.mxu0 0.0
    %422 = vmatprep.subr.mxu0 0.0
    %423 = vmatpush1.msra.mxu0 0.0
    %424 = vmatprep.subr.mxu0 0.0
    %425 = vmatpush1.msra.mxu0 0.0
    %426 = vmatprep.subr.mxu0 0.0
    %427 = vmatpush1.msra.mxu0 0.0
    %428 = vmatprep.subr.mxu0 0.0
    %429 = vmatpush1.msra.mxu0 0.0
    %430 = vmatprep.subr.mxu0 0.0
    %431 = vmatpush1.msra.mxu0 0.0
    %432 = vmatprep.subr.mxu0 0.0
    %433 = vmatpush1.msra.mxu0 0.0
    %434 = vmatprep.subr.mxu0 0.0
    %435 = vmatpush1.msra.mxu0 0.0
    %436 = vmatprep.subr.mxu0 0.0
    %437 = vmatpush1.msra.mxu0 0.0
    %438 = vmatprep.subr.mxu0 0.0
    %439 = vmatpush1.msra.mxu0 0.0
    %440 = vmatprep.subr.mxu0 0.0
    %441 = vmatpush1.msra.mxu0 0.0
    %442 = vmatprep.subr.mxu0 0.0
    %443 = vmatpush1.msra.mxu0 0.0
    %444 = vmatprep.subr.mxu0 0.0
    %445 = vmatpush1.msra.mxu0 0.0
    %446 = vmatprep.mubr.f32.mxu0 0.0
    %447 = vmatmul.mubr.f32.gmra.mrb[0].mxu0 %v377
    %v448 = vpop.f32.mrb[0].mxu0
    %v449 = vadd.f32 %v381, %v448
    %v450 = vpop.f32.mrb[0].mxu0
    %451 = vdwg.mxu0
    %453 = vrot.lane.b32.xlu0 %v449, 96
    %v454 = vpop.permute.xlu0 %453
    %v456 = vmax.f32 %v449, %v454
    %457 = vrot.lane.b32.xlu0 %v449, 64
    %v458 = vpop.permute.xlu0 %457
    %v460 = vmax.f32 %v456, %v458
    %v461 = vsub.f32 %v449, %v460
    %463 = vrot.lane.b32.xlu0 %v460, 32
    %v464 = vpop.permute.xlu0 %463
    %v466 = vsub.f32 %v449, %v464
    %467 = vrot.lane.b32.xlu0 %v460, 64
    %v468 = vpop.permute.xlu0 %467
    %v470 = vsub.f32 %v449, %v468
    %vm471 = vcmask 261120
    %v472 = vsel %vm471, %v461, %v466
    %vm473 = vcmask 523264
    %v474 = vsel %vm473, %v472, %v470
    %v475 = vmul.f32 %v474, 1.442695
    %v476 = vpow.pop %v475
    %478 = vrot.lane.b32.xlu0 %v476, 96
    %v479 = vpop.permute.xlu0 %478
    %v481 = vadd.f32 %v476, %v479
    %482 = vrot.lane.b32.xlu0 %v476, 64
    %v483 = vpop.permute.xlu0 %482
    %v485 = vadd.f32 %v481, %v483
    %v486 = vrcp.pop %v485
    %v487 = vmul.f32 %v485, %v486
    %v488 = vsub.f32 2.0, %v487
    %v489 = vmul.f32 %v486, %v488
    %v490 = vmul.f32 %v59, %v489
    %492 = vrot.lane.b32.xlu0 %v490, 32
    %v493 = vpop.permute.xlu0 %492
    %495 = vrot.lane.b32.xlu0 %v490, 64
    %v496 = vpop.permute.xlu0 %495
    %v498 = vsel %vm471, %v490, %v493
    %v499 = vsel %vm473, %v498, %v496
    %v500 = vmul.f32 %v476, %v499
    %v501 = vld [vmem:[%s4] sm:$0xff]
    %v502 = vld [vmem:[%s4 + $0x8] sm:$0xff]
    %v503 = vld [vmem:[%s4 + $0x10] sm:$0xff]
    %v504 = vld [vmem:[%s4 + $0x18] sm:$0xff]
    %v505 = vld [vmem:[%s4 + $0x20] sm:$0xff]
    %v506 = vld [vmem:[%s4 + $0x28] sm:$0xff]
    %v507 = vld [vmem:[%s4 + $0x30] sm:$0xff]
    %v508 = vld [vmem:[%s4 + $0x38] sm:$0xff]
    %v509 = vld [vmem:[%s4 + $0x40] sm:$0xff]
    %v510 = vld [vmem:[%s4 + $0x48] sm:$0xff]
    %v511 = vld [vmem:[%s4 + $0x50] sm:$0xff]
    %v512 = vld [vmem:[%s4 + $0x58] sm:$0xff]
    %vm513 = vcmask 785408
    %v515 = vsel %vm513, %v500, 0
    %517 = vmatprep.subr.mxu0 0.0
    %518 = vmatpush1.msra.mxu0 %v501
    %519 = vmatprep.subr.mxu0 0.0
    %520 = vmatpush1.msra.mxu0 %v502
    %521 = vmatprep.subr.mxu0 0.0
    %522 = vmatpush1.msra.mxu0 %v503
    %523 = vmatprep.subr.mxu0 0.0
    %524 = vmatpush1.msra.mxu0 %v504
    %525 = vmatprep.subr.mxu0 0.0
    %526 = vmatpush1.msra.mxu0 %v505
    %527 = vmatprep.subr.mxu0 0.0
    %528 = vmatpush1.msra.mxu0 %v506
    %529 = vmatprep.subr.mxu0 0.0
    %530 = vmatpush1.msra.mxu0 %v507
    %531 = vmatprep.subr.mxu0 0.0
    %532 = vmatpush1.msra.mxu0 %v508
    %533 = vmatprep.subr.mxu0 0.0
    %534 = vmatpush1.msra.mxu0 %v509
    %535 = vmatprep.subr.mxu0 0.0
    %536 = vmatpush1.msra.mxu0 %v510
    %537 = vmatprep.subr.mxu0 0.0
    %538 = vmatpush1.msra.mxu0 %v511
    %539 = vmatprep.subr.mxu0 0.0
    %540 = vmatpush1.msra.mxu0 %v512
    %541 = vmatprep.subr.mxu0 0.0
    %542 = vmatpush1.msra.mxu0 0.0
    %543 = vmatprep.subr.mxu0 0.0
    %544 = vmatpush1.msra.mxu0 0.0
    %545 = vmatprep.subr.mxu0 0.0
    %546 = vmatpush1.msra.mxu0 0.0
    %547 = vmatprep.subr.mxu0 0.0
    %548 = vmatpush1.msra.mxu0 0.0
    %549 = vmatprep.subr.mxu0 0.0
    %550 = vmatpush1.msra.mxu0 0.0
    %551 = vmatprep.subr.mxu0 0.0
    %552 = vmatpush1.msra.mxu0 0.0
    %553 = vmatprep.subr.mxu0 0.0
    %554 = vmatpush1.msra.mxu0 0.0
    %555 = vmatprep.subr.mxu0 0.0
    %556 = vmatpush1.msra.mxu0 0.0
    %557 = vmatprep.subr.mxu0 0.0
    %558 = vmatpush1.msra.mxu0 0.0
    %559 = vmatprep.subr.mxu0 0.0
    %560 = vmatpush1.msra.mxu0 0.0
    %561 = vmatprep.subr.mxu0 0.0
    %562 = vmatpush1.msra.mxu0 0.0
    %563 = vmatprep.subr.mxu0 0.0
    %564 = vmatpush1.msra.mxu0 0.0
    %565 = vmatprep.subr.mxu0 0.0
    %566 = vmatpush1.msra.mxu0 0.0
    %567 = vmatprep.subr.mxu0 0.0
    %568 = vmatpush1.msra.mxu0 0.0
    %569 = vmatprep.subr.mxu0 0.0
    %570 = vmatpush1.msra.mxu0 0.0
    %571 = vmatprep.subr.mxu0 0.0
    %572 = vmatpush1.msra.mxu0 0.0
    %573 = vmatprep.subr.mxu0 0.0
    %574 = vmatpush1.msra.mxu0 0.0
    %575 = vmatprep.subr.mxu0 0.0
    %576 = vmatpush1.msra.mxu0 0.0
    %577 = vmatprep.subr.mxu0 0.0
    %578 = vmatpush1.msra.mxu0 0.0
    %579 = vmatprep.subr.mxu0 0.0
    %580 = vmatpush1.msra.mxu0 0.0
    %581 = vmatprep.mubr.f32.mxu0 0.0
    %582 = vmatmul.mubr.f32.gmra.mrb[0].mxu0 %v515
    %v583 = vpop.f32.mrb[0].mxu0
    %v584 = vadd.f32 0.0, %v583
    %v585 = vpop.f32.mrb[0].mxu0
    %586 = vdwg.mxu0
    %588 = vrot.lane.b32.xlu0 %v584, 124
    %v589 = vpop.permute.xlu0 %588
    %v591 = vmax.f32 %v584, %v589
    %592 = vrot.lane.b32.xlu0 %v584, 120
    %v593 = vpop.permute.xlu0 %592
    %v595 = vmax.f32 %v591, %v593
    %v596 = vsub.f32 %v584, %v595
    %598 = vrot.lane.b32.xlu0 %v595, 4
    %v599 = vpop.permute.xlu0 %598
    %v601 = vsub.f32 %v584, %v599
    %602 = vrot.lane.b32.xlu0 %v595, 8
    %v603 = vpop.permute.xlu0 %602
    %v605 = vsub.f32 %v584, %v603
    %vm606 = vcmask 31744
    %v607 = vsel %vm606, %v596, %v601
    %vm608 = vcmask 64512
    %v609 = vsel %vm608, %v607, %v605
    %v610 = vmul.f32 %v609, 1.442695
    %v611 = vpow.pop %v610
    %613 = vrot.lane.b32.xlu0 %v611, 124
    %v614 = vpop.permute.xlu0 %613
    %v616 = vadd.f32 %v611, %v614
    %617 = vrot.lane.b32.xlu0 %v611, 120
    %v618 = vpop.permute.xlu0 %617
    %v620 = vadd.f32 %v616, %v618
    %v621 = vrcp.pop %v620
    %v622 = vmul.f32 %v620, %v621
    %v623 = vsub.f32 2.0, %v622
    %v624 = vmul.f32 %v621, %v623
    %626 = vrot.lane.b32.xlu0 %v624, 4
    %v627 = vpop.permute.xlu0 %626
    %629 = vrot.lane.b32.xlu0 %v624, 8
    %v630 = vpop.permute.xlu0 %629
    %v632 = vsel %vm606, %v624, %v627
    %v633 = vsel %vm608, %v632, %v630
    %v634 = vmul.f32 %v611, %v633
    %636 = vrot.lane.b32.xlu0 %v634, 4
    %v637 = vpop.permute.xlu0 %636
    %v639 = vsel %vm606, %v66, %v637
    %640 = vst.msk [vmem:[#allocation5] sm:$0xff] %vm58, %v639
    // Predicated region
    $region26: #{tpu_custom_call.1} parent=1 // pred_check
      _
    $region27: #{tpu_custom_call.1} parent=1 // pred_check_branch
      %642 = sbr.rel (0) target = $region29
    $region28: #{tpu_custom_call.1} parent=1 // pred_region
      %s644 = ssub.s32 128, 128
      %645 = vsyncadd [#allocation4], %s644
      %s647 = sshll.u32 [#allocation5], 4
      %s648 = int_to_ptr.vmem [resolvable:$true] %s647
      %650 = dma.vmem_to_hbm [thread:$0]  %s648, 128, %s5, [#allocation4]
    $region29: #{tpu_custom_call.1} parent=1 // pred_fallthru
      _
    // Predicated region
    $region30: #{tpu_custom_call.1} parent=1 // pred_check
      _
    $region31: #{tpu_custom_call.1} parent=1 // pred_check_branch
      %652 = sbr.rel (0) target = $region33
    $region32: #{tpu_custom_call.1} parent=1 // pred_region
      %653 = dma.done [#allocation4], 128
    $region33: #{tpu_custom_call.1} parent=1 // pred_fallthru
      _
    %654 = vsyncpa [#allocation3], 1
    %655 = vsyncpa [#allocation4], 1

</llo_original>
